<compile_context>
chip_gen: v5e
topology: v5e:2x2
jax: 0.10.0
libtpu: 0.0.40
codegen_flags: <defaults>
</compile_context>

<pallas_src>
import jax
import jax.numpy as jnp
from jax import lax
from jax.experimental import pallas as pl
from jax.experimental.pallas import tpu as pltpu

HIDDEN = 768       # BERT-base hidden size (fixed by the module: nn.Linear(768, 2))
NUM_LABELS = 2
LANES = 128        # vreg lane width (last-dim padding granule)
SUBLANES = 8       # vreg sublane count (second-to-last-dim padding granule)

# x[TB,768] contracted with w[2,768] on their last dims -> [TB,2]  (x @ w^T).
_NT_DIM_NUMBERS = (((1,), (1,)), ((), ()))


def _encoder_head_kernel(x_ref, w_ref, o_ref):
    # x_ref: [TB, 768] activation tile (pipelined), w_ref: [2, 768] resident
    # torch-layout weight, o_ref: [TB, 2].
    # Transposed-rhs MXU matmul with f32 accumulation, tanh in f32 (EUP),
    # then cast to the output dtype (= activation dtype).
    scores = lax.dot_general(
        x_ref[...], w_ref[...], _NT_DIM_NUMBERS,
        preferred_element_type=jnp.float32)
    o_ref[...] = jnp.tanh(scores).astype(o_ref.dtype)


def _round_up(x, m):
    return ((x + m - 1) // m) * m


def _pick_block_rows(batch, x_itemsize, w_itemsize, budget_bytes):
    """Rows per activation tile, sized from the REAL double-buffered VMEM
    footprint including lane/sublane padding:
        x tile  : 2 * TB * 768 * x_itemsize
        out tile: 2 * TB * 128 * x_itemsize    ([TB,2] pads to 128 lanes)
        weight  : 2 *  8 * 768 * w_itemsize    ([2,768] pads to 8 sublanes)
    The default 12 MiB total budget fits every generation's default scoped
    VMEM (16 MiB v5e, 32 MiB v6e/v7x) for both f32 and bf16 activations
    (f32 -> TB ~= 1744 rows, bf16 -> TB ~= 3504 rows)."""
    weight_bytes = 2 * SUBLANES * HIDDEN * w_itemsize
    per_row_bytes = 2 * (HIDDEN + LANES) * x_itemsize   # x + padded out, x2 buffers
    tb = (budget_bytes - weight_bytes) // per_row_bytes
    tb = max(SUBLANES, (tb // SUBLANES) * SUBLANES)
    if batch <= tb:
        return batch                    # single full-extent block: always legal
    # Keep >= 4 grid steps so v7x's two TensorCores each get >= 2 pipelined
    # steps ("parallel" sharding + double-buffering both need it).
    tb = min(tb, _round_up(-(-batch // 4), SUBLANES))
    return max(SUBLANES, tb)


def encoder_forward(bert_rep_batch, label_rep_weight, *, block_rows=None,
                    vmem_budget_bytes=12 * 1024 * 1024):
    """tanh(bert_rep_batch @ label_rep_weight.T), no bias (matches the module).

    bert_rep_batch:   [B, 768] float32 or bfloat16 (BERT rep per sentence pair)
    label_rep_weight: [2, 768] -- PyTorch nn.Linear(768, 2, bias=False) layout.
    Returns [B, 2] in bert_rep_batch.dtype (tanh computed in f32).
    """
    B, H = bert_rep_batch.shape
    assert H == HIDDEN
    assert label_rep_weight.shape == (NUM_LABELS, HIDDEN)

    # Keep both MXU operands in the activation dtype: bf16 activations use the
    # native bf16 MXU path (f32 accumulation) instead of up-casting the big
    # activation tile on the VPU.
    if label_rep_weight.dtype != bert_rep_batch.dtype:
        label_rep_weight = label_rep_weight.astype(bert_rep_batch.dtype)

    x_itemsize = jnp.dtype(bert_rep_batch.dtype).itemsize
    w_itemsize = jnp.dtype(label_rep_weight.dtype).itemsize
    tb = (block_rows if block_rows is not None
          else _pick_block_rows(B, x_itemsize, w_itemsize, vmem_budget_bytes))

    cost = pl.CostEstimate(
        flops=2 * B * HIDDEN * NUM_LABELS,
        transcendentals=B * NUM_LABELS,
        bytes_accessed=(B * HIDDEN * x_itemsize
                        + NUM_LABELS * HIDDEN * w_itemsize
                        + B * NUM_LABELS * x_itemsize),
    )

    return pl.pallas_call(
        _encoder_head_kernel,
        out_shape=jax.ShapeDtypeStruct((B, NUM_LABELS), bert_rep_batch.dtype),
        grid_spec=pltpu.PrefetchScalarGridSpec(
            num_scalar_prefetch=0,
            grid=(pl.cdiv(B, tb),),
            in_specs=[
                # Activation: tiled over the batch axis (double-buffered).
                pl.BlockSpec((tb, HIDDEN), lambda i: (i, 0)),
                # Weight: tiny torch-layout [2,768] block, VMEM-resident.
                pl.BlockSpec((NUM_LABELS, HIDDEN), lambda i: (0, 0)),
            ],
            out_specs=pl.BlockSpec((tb, NUM_LABELS), lambda i: (i, 0)),
        ),
        compiler_params=pltpu.CompilerParams(
            # Batch tiles are independent -> shard across TensorCores on v7x.
            dimension_semantics=("parallel",),
        ),
        cost_estimate=cost,
    )(bert_rep_batch, label_rep_weight)


def encoder_head(bert_rep_batch, label_rep_weight, *, min_pallas_rows=512):
    """Dispatcher: for tiny batches a fused XLA op beats the fixed pallas_call
    launch overhead; use the Pallas kernel only for large batches."""
    if bert_rep_batch.shape[0] < min_pallas_rows:
        return jnp.tanh(
            jnp.dot(bert_rep_batch, label_rep_weight.T,
                    preferred_element_type=jnp.float32)
        ).astype(bert_rep_batch.dtype)
    return encoder_forward(bert_rep_batch, label_rep_weight)


if __name__ == "__main__":
    key = jax.random.PRNGKey(0)
    k_x, k_w, k_x2, k_x3 = jax.random.split(key, 4)

    # nn.Linear(768, 2, bias=False): torch weight layout is [2, 768].
    label_rep_weight = (
        jax.random.normal(k_w, (NUM_LABELS, HIDDEN), dtype=jnp.float32) * 0.02)

    # --- Test 1: small demo batch (single full-extent block). ---------------
    B = 8
    x = jax.random.normal(k_x, (B, HIDDEN), dtype=jnp.float32)
    out = jax.block_until_ready(encoder_forward(x, label_rep_weight))
    ref = jnp.tanh(x @ label_rep_weight.T)
    assert out.shape == (B, NUM_LABELS) and out.dtype == jnp.float32
    assert jnp.allclose(out, ref, atol=1e-5, rtol=1e-5)

    # --- Test 2: batch not divisible by the tile (partial last block). ------
    B2 = 20
    x2 = jax.random.normal(k_x2, (B2, HIDDEN), dtype=jnp.float32)
    out2 = jax.block_until_ready(
        encoder_forward(x2, label_rep_weight, block_rows=8))  # grid=(3,)
    ref2 = jnp.tanh(x2 @ label_rep_weight.T)
    assert out2.shape == (B2, NUM_LABELS)
    assert jnp.allclose(out2, ref2, atol=1e-5, rtol=1e-5)

    # --- Test 3: bf16 activations (native bf16 MXU path, bf16 output). ------
    B3 = 16
    x3 = jax.random.normal(k_x3, (B3, HIDDEN), dtype=jnp.float32).astype(jnp.bfloat16)
    out3 = jax.block_until_ready(
        encoder_forward(x3, label_rep_weight, block_rows=8))  # grid=(2,)
    assert out3.shape == (B3, NUM_LABELS) and out3.dtype == jnp.bfloat16
    w_bf = label_rep_weight.astype(jnp.bfloat16)
    ref3 = jnp.tanh(x3.astype(jnp.float32) @ w_bf.astype(jnp.float32).T)
    assert jnp.allclose(out3.astype(jnp.float32), ref3, atol=2e-2, rtol=2e-2)

    print("KERNEL_OK")
</pallas_src>

<mosaic_0001>
module attributes {stable_mosaic.version = 11 : i64} {
  func.func @_encoder_head_kernel(%arg0: i32, %arg1: memref<8x768xf32, #tpu.memory_space<vmem>>, %arg2: memref<2x768xf32, #tpu.memory_space<vmem>>, %arg3: memref<8x2xf32, #tpu.memory_space<vmem>>) attributes {dimension_semantics = [#tpu.dimension_semantics<parallel>], iteration_bounds = array<i64: 1>, scalar_prefetch = 0 : i64, scratch_operands = 0 : i64, tpu.core_type = #tpu.core_type<tc>, window_params = [{transform_indices = @transform_0, window_bounds = array<i64: 8, 768>}, {pipeline_mode = #tpu.pipeline_mode<synchronous>, transform_indices = @transform_1, window_bounds = array<i64: 2, 768>}, {transform_indices = @transform_2, window_bounds = array<i64: 8, 2>}]} {
    %c0 = arith.constant 0 : index
    %c0_0 = arith.constant 0 : index
    %0 = vector.load %arg1[%c0, %c0_0] : memref<8x768xf32, #tpu.memory_space<vmem>>, vector<8x768xf32>
    %c0_1 = arith.constant 0 : index
    %c0_2 = arith.constant 0 : index
    %1 = vector.load %arg2[%c0_1, %c0_2] : memref<2x768xf32, #tpu.memory_space<vmem>>, vector<2x768xf32>
    %cst = arith.constant dense<0.000000e+00> : vector<8x2xf32>
    %2 = tpu.matmul %0, %1, %cst {dimension_numbers = #tpu.dot_dimension_numbers<[1], [1], [0], [0], [0, 0, 1, 0], [], []>} : vector<8x768xf32>, vector<2x768xf32>, vector<8x2xf32> -> vector<8x2xf32>
    %3 = math.tanh %2 : vector<8x2xf32>
    %c0_3 = arith.constant 0 : index
    %c0_4 = arith.constant 0 : index
    %4 = vector.load %arg3[%c0_3, %c0_4] : memref<8x2xf32, #tpu.memory_space<vmem>>, vector<8x2xf32>
    tpu.vector_store %arg3[%c0_3, %c0_4], %3 {strides = array<i32>} : memref<8x2xf32, #tpu.memory_space<vmem>>, vector<8x2xf32>,
    return
  }
  func.func @transform_0(%arg0: i32) -> (i32, i32) {
    %c0_i32 = arith.constant 0 : i32
    %c0_i32_0 = arith.constant 0 : i32
    return %arg0, %c0_i32 : i32, i32
  }
  func.func @transform_1(%arg0: i32) -> (i32, i32) {
    %c0_i32 = arith.constant 0 : i32
    %c0_i32_0 = arith.constant 0 : i32
    %c0_i32_1 = arith.constant 0 : i32
    return %c0_i32, %c0_i32_0 : i32, i32
  }
  func.func @transform_2(%arg0: i32) -> (i32, i32) {
    %c0_i32 = arith.constant 0 : i32
    %c0_i32_0 = arith.constant 0 : i32
    return %arg0, %c0_i32 : i32, i32
  }
}

</mosaic_0001>

<llo_original>
// kernel: tpu_custom_call.1
$region0: #{tpu_custom_call.1}
  #allocation0 [shape = 'u32[]', space=smem, size = 0x4, offset = 0x4, fixed_abs, tag = 'smem constant byte address 0x4 - core index']
  #allocation1 [shape = 'u32[72,128]{1,0:T(1,128)}', space=vmem, size = 0x9000, scoped, tag = 'internal scratch']
  %s0 = inlined_call_operand.hbm [shape: f32[8,768], index: 0, kind: input, shape index: {}]
  %s1 = inlined_call_operand.hbm [shape: f32[2,768], index: 1, kind: input, shape index: {}]
  %s2 = inlined_call_operand.vmem [shape: f32[8,2], index: 2, kind: output, shape index: {}]
  %s3 = sld [smem:[#allocation0]]
  $region26: #{tpu_custom_call.1} parent=0
    _
  %s5 = ssub.s32 1, %s3
  %s6 = scalar_select 0, %s5, %s3
  $region1: #{tpu_custom_call.1} parent=0
    #allocation2 [shape = 'u8[24576]{0}', space=vmem, size = 0x6000, scoped, tag = 'input window, operand 0, single buffered']
    #allocation3 [shape = 's32[1]{0}', space=sflag, size = 0x4, scoped, tag = 'scoped memory for tpu_custom_call.1']
    #allocation4 [shape = 'u8[6144]{0}', space=vmem, size = 0x1800, scoped, tag = 'input window, operand 1, single buffered']
    #allocation5 [shape = 's32[1]{0}', space=sflag, size = 0x4, scoped, tag = 'scoped memory for tpu_custom_call.1']
    %7 = vsyncpa [#allocation3], 0
    %8 = vsyncpa [#allocation5], 0
    // Predicated region
    $region2: #{tpu_custom_call.1} parent=1 // pred_check
      _
    $region3: #{tpu_custom_call.1} parent=1 // pred_check_branch
      %10 = sbr.rel (0) target = $region5
    $region4: #{tpu_custom_call.1} parent=1 // pred_region
      %12 = vsyncadd [#allocation3], 0
      %s14 = sshll.u32 %s0, 4
      %s15 = int_to_ptr.hbm [resolvable:$true] %s14
      %s16 = sshll.u32 [#allocation2], 4
      %s17 = int_to_ptr.vmem [resolvable:$true] %s16
      %19 = dma.hbm_to_vmem [thread:$0]  %s15, 768, %s17, [#allocation3]
    $region5: #{tpu_custom_call.1} parent=1 // pred_fallthru
      _
    // Predicated region
    $region6: #{tpu_custom_call.1} parent=1 // pred_check
      _
    $region7: #{tpu_custom_call.1} parent=1 // pred_check_branch
      %21 = sbr.rel (0) target = $region9
    $region8: #{tpu_custom_call.1} parent=1 // pred_region
      %23 = vsyncadd [#allocation5], 0
      %s25 = sshll.u32 %s1, 4
      %s26 = int_to_ptr.hbm [resolvable:$true] %s25
      %s27 = sshll.u32 [#allocation4], 4
      %s28 = int_to_ptr.vmem [resolvable:$true] %s27
      %30 = dma.hbm_to_vmem [thread:$0]  %s26, 192, %s28, [#allocation5]
    $region9: #{tpu_custom_call.1} parent=1 // pred_fallthru
      _
    // Predicated region
    $region10: #{tpu_custom_call.1} parent=1 // pred_check
      _
    $region11: #{tpu_custom_call.1} parent=1 // pred_check_branch
      %32 = sbr.rel (0) target = $region13
    $region12: #{tpu_custom_call.1} parent=1 // pred_region
      %34 = dma.done [#allocation3], 768
    $region13: #{tpu_custom_call.1} parent=1 // pred_fallthru
      _
    // Predicated region
    $region14: #{tpu_custom_call.1} parent=1 // pred_check
      _
    $region15: #{tpu_custom_call.1} parent=1 // pred_check_branch
      %36 = sbr.rel (0) target = $region17
    $region16: #{tpu_custom_call.1} parent=1 // pred_region
      %38 = dma.done [#allocation5], 192
    $region17: #{tpu_custom_call.1} parent=1 // pred_fallthru
      _
    %v39 = vld [vmem:[#allocation2] sm:$0xff]
    %v40 = vld [vmem:[#allocation2 + $0x8] sm:$0xff]
    %v41 = vld [vmem:[#allocation2 + $0x10] sm:$0xff]
    %v42 = vld [vmem:[#allocation2 + $0x18] sm:$0xff]
    %v43 = vld [vmem:[#allocation2 + $0x20] sm:$0xff]
    %v44 = vld [vmem:[#allocation2 + $0x28] sm:$0xff]
    %v45 = vld [vmem:[#allocation4] sm:$0xff]
    %v46 = vld [vmem:[#allocation4 + $0x8] sm:$0xf]
    %49 = vst [vmem:[#allocation1] ss:$4 sm:$0xff] %v45
    %s50 = scalar_lea.vmem [#allocation1], 32
    %51 = vst [vmem:[%s50] ss:$4 sm:$0xff] %v46
    %v52 = vld.sshfl [vmem:[#allocation1] sm:$0xff pattern:$0x73625140]
    %v53 = vld.sshfl [vmem:[#allocation1 + $0x8] sm:$0xff pattern:$0x73625140]
    %v54 = vld.sshfl [vmem:[#allocation1 + $0x10] sm:$0xff pattern:$0x73625140]
    %v55 = vld.sshfl [vmem:[#allocation1 + $0x18] sm:$0xff pattern:$0x73625140]
    %v56 = vld.sshfl [vmem:[#allocation1 + $0x20] sm:$0xff pattern:$0x73625140]
    %v57 = vld.sshfl [vmem:[#allocation1 + $0x28] sm:$0xff pattern:$0x73625140]
    %64 = vmatpush.xpose.msra.mxu0 0.0
    %65 = vmatpush.xpose.msra.mxu0 0.0
    %66 = vmatpush.xpose.msra.mxu0 0.0
    %67 = vmatpush.xpose.msra.mxu0 0.0
    %68 = vmatpush.xpose.msra.mxu0 0.0
    %69 = vmatpush.xpose.msra.mxu0 0.0
    %70 = vmatpush.xpose.msra.mxu0 0.0
    %71 = vmatpush.xpose.msra.mxu0 0.0
    %72 = vmatpush.xpose.msra.mxu0 0.0
    %73 = vmatpush.xpose.msra.mxu0 0.0
    %74 = vmatpush.xpose.msra.mxu0 0.0
    %75 = vmatpush.xpose.msra.mxu0 0.0
    %76 = vmatpush.xpose.msra.mxu0 0.0
    %77 = vmatpush.xpose.msra.mxu0 0.0
    %78 = vmatpush.xpose.msra.mxu0 0.0
    %79 = vmatpush.xpose.msra.mxu0 %v52
    %80 = vmatmul.f32.gmra.mxu0 %v39
    %v81 = vpop.f32.mrf.mxu0
    %v82 = vadd.f32 0.0, %v81
    %83 = vdwg.mxu0
    %84 = vmatpush.xpose.msra.mxu0 0.0
    %85 = vmatpush.xpose.msra.mxu0 0.0
    %86 = vmatpush.xpose.msra.mxu0 0.0
    %87 = vmatpush.xpose.msra.mxu0 0.0
    %88 = vmatpush.xpose.msra.mxu0 0.0
    %89 = vmatpush.xpose.msra.mxu0 0.0
    %90 = vmatpush.xpose.msra.mxu0 0.0
    %91 = vmatpush.xpose.msra.mxu0 0.0
    %92 = vmatpush.xpose.msra.mxu0 0.0
    %93 = vmatpush.xpose.msra.mxu0 0.0
    %94 = vmatpush.xpose.msra.mxu0 0.0
    %95 = vmatpush.xpose.msra.mxu0 0.0
    %96 = vmatpush.xpose.msra.mxu0 0.0
    %97 = vmatpush.xpose.msra.mxu0 0.0
    %98 = vmatpush.xpose.msra.mxu0 0.0
    %99 = vmatpush.xpose.msra.mxu0 %v53
    %100 = vmatmul.f32.gmra.mxu0 %v40
    %v101 = vpop.f32.mrf.mxu0
    %v102 = vadd.f32 %v82, %v101
    %103 = vdwg.mxu0
    %104 = vmatpush.xpose.msra.mxu0 0.0
    %105 = vmatpush.xpose.msra.mxu0 0.0
    %106 = vmatpush.xpose.msra.mxu0 0.0
    %107 = vmatpush.xpose.msra.mxu0 0.0
    %108 = vmatpush.xpose.msra.mxu0 0.0
    %109 = vmatpush.xpose.msra.mxu0 0.0
    %110 = vmatpush.xpose.msra.mxu0 0.0
    %111 = vmatpush.xpose.msra.mxu0 0.0
    %112 = vmatpush.xpose.msra.mxu0 0.0
    %113 = vmatpush.xpose.msra.mxu0 0.0
    %114 = vmatpush.xpose.msra.mxu0 0.0
    %115 = vmatpush.xpose.msra.mxu0 0.0
    %116 = vmatpush.xpose.msra.mxu0 0.0
    %117 = vmatpush.xpose.msra.mxu0 0.0
    %118 = vmatpush.xpose.msra.mxu0 0.0
    %119 = vmatpush.xpose.msra.mxu0 %v54
    %120 = vmatmul.f32.gmra.mxu0 %v41
    %v121 = vpop.f32.mrf.mxu0
    %v122 = vadd.f32 %v102, %v121
    %123 = vdwg.mxu0
    %124 = vmatpush.xpose.msra.mxu0 0.0
    %125 = vmatpush.xpose.msra.mxu0 0.0
    %126 = vmatpush.xpose.msra.mxu0 0.0
    %127 = vmatpush.xpose.msra.mxu0 0.0
    %128 = vmatpush.xpose.msra.mxu0 0.0
    %129 = vmatpush.xpose.msra.mxu0 0.0
    %130 = vmatpush.xpose.msra.mxu0 0.0
    %131 = vmatpush.xpose.msra.mxu0 0.0
    %132 = vmatpush.xpose.msra.mxu0 0.0
    %133 = vmatpush.xpose.msra.mxu0 0.0
    %134 = vmatpush.xpose.msra.mxu0 0.0
    %135 = vmatpush.xpose.msra.mxu0 0.0
    %136 = vmatpush.xpose.msra.mxu0 0.0
    %137 = vmatpush.xpose.msra.mxu0 0.0
    %138 = vmatpush.xpose.msra.mxu0 0.0
    %139 = vmatpush.xpose.msra.mxu0 %v55
    %140 = vmatmul.f32.gmra.mxu0 %v42
    %v141 = vpop.f32.mrf.mxu0
    %v142 = vadd.f32 %v122, %v141
    %143 = vdwg.mxu0
    %144 = vmatpush.xpose.msra.mxu0 0.0
    %145 = vmatpush.xpose.msra.mxu0 0.0
    %146 = vmatpush.xpose.msra.mxu0 0.0
    %147 = vmatpush.xpose.msra.mxu0 0.0
    %148 = vmatpush.xpose.msra.mxu0 0.0
    %149 = vmatpush.xpose.msra.mxu0 0.0
    %150 = vmatpush.xpose.msra.mxu0 0.0
    %151 = vmatpush.xpose.msra.mxu0 0.0
    %152 = vmatpush.xpose.msra.mxu0 0.0
    %153 = vmatpush.xpose.msra.mxu0 0.0
    %154 = vmatpush.xpose.msra.mxu0 0.0
    %155 = vmatpush.xpose.msra.mxu0 0.0
    %156 = vmatpush.xpose.msra.mxu0 0.0
    %157 = vmatpush.xpose.msra.mxu0 0.0
    %158 = vmatpush.xpose.msra.mxu0 0.0
    %159 = vmatpush.xpose.msra.mxu0 %v56
    %160 = vmatmul.f32.gmra.mxu0 %v43
    %v161 = vpop.f32.mrf.mxu0
    %v162 = vadd.f32 %v142, %v161
    %163 = vdwg.mxu0
    %164 = vmatpush.xpose.msra.mxu0 0.0
    %165 = vmatpush.xpose.msra.mxu0 0.0
    %166 = vmatpush.xpose.msra.mxu0 0.0
    %167 = vmatpush.xpose.msra.mxu0 0.0
    %168 = vmatpush.xpose.msra.mxu0 0.0
    %169 = vmatpush.xpose.msra.mxu0 0.0
    %170 = vmatpush.xpose.msra.mxu0 0.0
    %171 = vmatpush.xpose.msra.mxu0 0.0
    %172 = vmatpush.xpose.msra.mxu0 0.0
    %173 = vmatpush.xpose.msra.mxu0 0.0
    %174 = vmatpush.xpose.msra.mxu0 0.0
    %175 = vmatpush.xpose.msra.mxu0 0.0
    %176 = vmatpush.xpose.msra.mxu0 0.0
    %177 = vmatpush.xpose.msra.mxu0 0.0
    %178 = vmatpush.xpose.msra.mxu0 0.0
    %179 = vmatpush.xpose.msra.mxu0 %v57
    %180 = vmatmul.f32.gmra.mxu0 %v44
    %v181 = vpop.f32.mrf.mxu0
    %v182 = vadd.f32 %v162, %v181
    %183 = vdwg.mxu0
    %v184 = vtanh.pop %v182
    %vm185 = vcmask 15360
    %186 = vst.msk [vmem:[%s2] sm:$0xff] %vm185, %v184
    // Predicated region
    $region18: #{tpu_custom_call.1} parent=1 // pred_check
      _
    $region19: #{tpu_custom_call.1} parent=1 // pred_check_branch
      %188 = sbr.rel (0) target = $region21
    $region20: #{tpu_custom_call.1} parent=1 // pred_region
      _
    $region21: #{tpu_custom_call.1} parent=1 // pred_fallthru
      _
    // Predicated region
    $region22: #{tpu_custom_call.1} parent=1 // pred_check
      _
    $region23: #{tpu_custom_call.1} parent=1 // pred_check_branch
      %190 = sbr.rel (0) target = $region25
    $region24: #{tpu_custom_call.1} parent=1 // pred_region
      _
    $region25: #{tpu_custom_call.1} parent=1 // pred_fallthru
      _
    %191 = vsyncpa [#allocation3], 1
    %192 = vsyncpa [#allocation5], 1

</llo_original>
